<compile_context>
chip_gen: v6e
topology: v6e:2x2x1
jax: 0.10.0
libtpu: 0.0.40
codegen_flags: <defaults>
</compile_context>

<pallas_src>
import jax
import jax.numpy as jnp
from jax.experimental import pallas as pl
from jax.experimental.pallas import tpu as pltpu


def _round_up(x, m):
    return (x + m - 1) // m * m


def timeblock_kernel(x_ref, w_ref, b_ref, o_ref):
    """Single fused GEMM + gated combine for one tile of rows.

    x_ref : (tile_r, T*C_in)     lane-dense input slab
    w_ref : (T*C_in, 3*G_pad)    fused block-Toeplitz weights [conv1|conv2|conv3]
    b_ref : (1, 3*G_pad)         fused per-column bias (f32)
    o_ref : (tile_r, G)          lane-dense output slab, G = T_out*C_out
    """
    g = o_ref.shape[1]
    gp = w_ref.shape[1] // 3          # lane-aligned group stride (multiple of 128)

    # One MXU matmul per tile; f32 accumulation regardless of I/O dtype.
    acc = jnp.dot(x_ref[...], w_ref[...], preferred_element_type=jnp.float32)
    acc = acc + b_ref[...]            # single fused bias add

    c1 = acc[:, 0 * gp:0 * gp + g]    # conv1
    c2 = acc[:, 1 * gp:1 * gp + g]    # conv2 (gate)
    c3 = acc[:, 2 * gp:2 * gp + g]    # conv3
    out = jnp.maximum(c1 + jax.nn.sigmoid(c2) + c3, 0.0)   # f32 elementwise
    o_ref[...] = out.astype(o_ref.dtype)


def _fuse_params(w1, w2, w3, b1, b2, b3, T, g_pad):
    """Lower the three (1,K) convs into one block-Toeplitz GEMM operand.

    Returns W_big (T*C_in, 3*g_pad) and bias_big (1, 3*g_pad).  Column group
    gi occupies [gi*g_pad, gi*g_pad + G) with layout t*C_out + o, so the
    kernel's output slab reshapes directly to (..., T_out, C_out).
    """
    K, C_in, C_out = w1.shape
    T_out = T - K + 1
    G = T_out * C_out
    w_big = jnp.zeros((T * C_in, 3 * g_pad), jnp.float32)
    b_big = jnp.zeros((1, 3 * g_pad), jnp.float32)
    for gi, (w, b) in enumerate(((w1, b1), (w2, b2), (w3, b3))):
        wg = jnp.zeros((T, C_in, T_out, C_out), jnp.float32)
        for t in range(T_out):                      # static unroll at trace time
            wg = wg.at[t:t + K, :, t, :].set(w.astype(jnp.float32))
        w_big = w_big.at[:, gi * g_pad:gi * g_pad + G].set(
            wg.reshape(T * C_in, G))
        b_big = b_big.at[:, gi * g_pad:gi * g_pad + G].set(
            jnp.tile(b.reshape(1, C_out).astype(jnp.float32), (1, T_out)))
    return w_big, b_big


def time_block(x, w1, w2, w3, b1, b2, b3, *, tile_r=512, compute_dtype=None):
    """x: (B,N,T,C_in); w_i: (K,C_in,C_out); b_i: (C_out,). -> (B,N,T_out,C_out)."""
    B, N, T, C_in = x.shape
    K, _, C_out = w1.shape
    T_out = T - K + 1
    G = T_out * C_out
    g_pad = _round_up(G, 128)        # lane-tile-aligned group stride
    R = B * N

    dt = jnp.dtype(compute_dtype) if compute_dtype is not None else x.dtype

    # Large row tiles (per-grid-step overhead ~0.35us); clip to the problem,
    # keep a multiple of 8 sublanes, zero-pad R up to a whole number of tiles.
    tile_r = _round_up(max(8, min(tile_r, _round_up(R, 8))), 8)
    R_pad = _round_up(R, tile_r)

    xr = x.reshape(R, T * C_in).astype(dt)          # lane-dense 2D input slab
    if R_pad != R:
        xr = jnp.pad(xr, ((0, R_pad - R), (0, 0)))

    w_big, b_big = _fuse_params(w1, w2, w3, b1, b2, b3, T, g_pad)
    w_big = w_big.astype(dt)                        # MXU input dtype (f32/bf16)
    # b_big stays f32: it is added to the f32 accumulator.

    out2d = pl.pallas_call(
        timeblock_kernel,
        out_shape=jax.ShapeDtypeStruct((R_pad, G), dt),
        grid=(R_pad // tile_r,),
        in_specs=[
            pl.BlockSpec((tile_r, T * C_in), lambda i: (i, 0)),
            pl.BlockSpec((T * C_in, 3 * g_pad), lambda i: (0, 0)),
            pl.BlockSpec((1, 3 * g_pad), lambda i: (0, 0)),
        ],
        out_specs=pl.BlockSpec((tile_r, G), lambda i: (i, 0)),
        compiler_params=pltpu.CompilerParams(
            dimension_semantics=("parallel",)),     # rows split across TCs on v7x
    )(xr, w_big, b_big)

    return out2d[:R].reshape(B, N, T_out, C_out)


def _reference(x, w1, w2, w3, b1, b2, b3):
    """Pure-JAX reference with identical semantics (for sanity check)."""
    K = w1.shape[0]
    T = x.shape[2]
    T_out = T - K + 1

    def conv(w, b):
        acc = jnp.zeros(x.shape[:2] + (T_out, w.shape[2]), jnp.float32)
        for k in range(K):
            acc = acc + jnp.einsum('bntc,cd->bntd',
                                   x[:, :, k:k + T_out, :].astype(jnp.float32),
                                   w[k])
        return acc + b.reshape(1, 1, 1, -1)

    c1 = conv(w1, b1)
    c2 = conv(w2, b2)
    c3 = conv(w3, b3)
    return jnp.maximum(c1 + jax.nn.sigmoid(c2) + c3, 0.0)


if __name__ == "__main__":
    # Small shapes consistent with the module's forward.
    B, N, T, C_in, C_out, K = 2, 8, 16, 4, 8, 3

    key = jax.random.PRNGKey(0)
    kx, k1, k2, k3, kb1, kb2, kb3, kx2 = jax.random.split(key, 8)

    x = jax.random.normal(kx, (B, N, T, C_in), dtype=jnp.float32)

    # Conv2d-style init: uniform(-bound, bound), bound = 1/sqrt(C_in * 1 * K).
    bound = float(C_in * K) ** -0.5
    w1 = jax.random.uniform(k1, (K, C_in, C_out), jnp.float32, -bound, bound)
    w2 = jax.random.uniform(k2, (K, C_in, C_out), jnp.float32, -bound, bound)
    w3 = jax.random.uniform(k3, (K, C_in, C_out), jnp.float32, -bound, bound)
    b1 = jax.random.uniform(kb1, (C_out,), jnp.float32, -bound, bound)
    b2 = jax.random.uniform(kb2, (C_out,), jnp.float32, -bound, bound)
    b3 = jax.random.uniform(kb3, (C_out,), jnp.float32, -bound, bound)

    # 1) f32 path, tight tolerance vs reference.
    out = jax.block_until_ready(time_block(x, w1, w2, w3, b1, b2, b3))
    ref = _reference(x, w1, w2, w3, b1, b2, b3)
    assert out.shape == (B, N, T - K + 1, C_out)
    assert jnp.allclose(out, ref, atol=1e-5, rtol=1e-5)

    # 2) bf16-I/O path (v6e/v7x recipe) on a ragged row count: exercises the
    #    R-padding and a multi-step "parallel" row grid (tile_r=8 -> 3 steps).
    B2, N2 = 3, 7
    x2 = jax.random.normal(kx2, (B2, N2, T, C_in), dtype=jnp.float32)
    out2 = jax.block_until_ready(
        time_block(x2, w1, w2, w3, b1, b2, b3,
                   tile_r=8, compute_dtype=jnp.bfloat16))
    ref2 = _reference(x2, w1, w2, w3, b1, b2, b3)
    assert out2.shape == (B2, N2, T - K + 1, C_out)
    assert jnp.allclose(out2.astype(jnp.float32), ref2, atol=1e-1, rtol=1e-1)

    print("KERNEL_OK")
</pallas_src>

<mosaic_0001>
module attributes {stable_mosaic.version = 11 : i64} {
  func.func @timeblock_kernel(%arg0: i32, %arg1: memref<16x64xf32, #tpu.memory_space<vmem>>, %arg2: memref<64x384xf32, #tpu.memory_space<vmem>>, %arg3: memref<1x384xf32, #tpu.memory_space<vmem>>, %arg4: memref<16x112xf32, #tpu.memory_space<vmem>>) attributes {dimension_semantics = [#tpu.dimension_semantics<parallel>], iteration_bounds = array<i64: 1>, scalar_prefetch = 0 : i64, scratch_operands = 0 : i64, tpu.core_type = #tpu.core_type<tc>, window_params = [{transform_indices = @transform_0, window_bounds = array<i64: 16, 64>}, {pipeline_mode = #tpu.pipeline_mode<synchronous>, transform_indices = @transform_1, window_bounds = array<i64: 64, 384>}, {pipeline_mode = #tpu.pipeline_mode<synchronous>, transform_indices = @transform_2, window_bounds = array<i64: 1, 384>}, {transform_indices = @transform_3, window_bounds = array<i64: 16, 112>}]} {
    %c0 = arith.constant 0 : index
    %c0_0 = arith.constant 0 : index
    %0 = vector.load %arg1[%c0, %c0_0] : memref<16x64xf32, #tpu.memory_space<vmem>>, vector<16x64xf32>
    %c0_1 = arith.constant 0 : index
    %c0_2 = arith.constant 0 : index
    %1 = vector.load %arg2[%c0_1, %c0_2] : memref<64x384xf32, #tpu.memory_space<vmem>>, vector<64x384xf32>
    %cst = arith.constant dense<0.000000e+00> : vector<16x384xf32>
    %2 = tpu.matmul %0, %1, %cst {dimension_numbers = #tpu.dot_dimension_numbers<[1], [0], [0], [1], [0, 0, 1, 1], [], []>} : vector<16x64xf32>, vector<64x384xf32>, vector<16x384xf32> -> vector<16x384xf32>
    %c0_3 = arith.constant 0 : index
    %c0_4 = arith.constant 0 : index
    %3 = vector.load %arg3[%c0_3, %c0_4] : memref<1x384xf32, #tpu.memory_space<vmem>>, vector<1x384xf32>
    %4 = vector.broadcast %3 : vector<1x384xf32> to vector<16x384xf32>
    %5 = arith.addf %2, %4 : vector<16x384xf32>
    %6 = vector.extract_strided_slice %5 {offsets = [0, 0], sizes = [16, 112], strides = [1, 1]} : vector<16x384xf32> to vector<16x112xf32>
    %7 = vector.extract_strided_slice %5 {offsets = [0, 128], sizes = [16, 112], strides = [1, 1]} : vector<16x384xf32> to vector<16x112xf32>
    %8 = vector.extract_strided_slice %5 {offsets = [0, 256], sizes = [16, 112], strides = [1, 1]} : vector<16x384xf32> to vector<16x112xf32>
    %9 = arith.negf %7 : vector<16x112xf32>
    %10 = math.exp %9 : vector<16x112xf32>
    %cst_5 = arith.constant 1.000000e+00 : f32
    %11 = vector.broadcast %cst_5 : f32 to vector<16x112xf32>
    %12 = arith.addf %11, %10 : vector<16x112xf32>
    %13 = arith.divf %11, %12 : vector<16x112xf32>
    %14 = arith.addf %6, %13 : vector<16x112xf32>
    %15 = arith.addf %14, %8 : vector<16x112xf32>
    %cst_6 = arith.constant 0.000000e+00 : f32
    %16 = vector.broadcast %cst_6 : f32 to vector<16x112xf32>
    %17 = arith.maximumf %15, %16 : vector<16x112xf32>
    %c0_7 = arith.constant 0 : index
    %c0_8 = arith.constant 0 : index
    %18 = vector.load %arg4[%c0_7, %c0_8] : memref<16x112xf32, #tpu.memory_space<vmem>>, vector<16x112xf32>
    tpu.vector_store %arg4[%c0_7, %c0_8], %17 {strides = array<i32>} : memref<16x112xf32, #tpu.memory_space<vmem>>, vector<16x112xf32>,
    return
  }
  func.func @transform_0(%arg0: i32) -> (i32, i32) {
    %c0_i32 = arith.constant 0 : i32
    %c0_i32_0 = arith.constant 0 : i32
    return %arg0, %c0_i32 : i32, i32
  }
  func.func @transform_1(%arg0: i32) -> (i32, i32) {
    %c0_i32 = arith.constant 0 : i32
    %c0_i32_0 = arith.constant 0 : i32
    %c0_i32_1 = arith.constant 0 : i32
    return %c0_i32, %c0_i32_0 : i32, i32
  }
  func.func @transform_2(%arg0: i32) -> (i32, i32) {
    %c0_i32 = arith.constant 0 : i32
    %c0_i32_0 = arith.constant 0 : i32
    %c0_i32_1 = arith.constant 0 : i32
    return %c0_i32, %c0_i32_0 : i32, i32
  }
  func.func @transform_3(%arg0: i32) -> (i32, i32) {
    %c0_i32 = arith.constant 0 : i32
    %c0_i32_0 = arith.constant 0 : i32
    return %arg0, %c0_i32 : i32, i32
  }
}

</mosaic_0001>

<llo_original>
// kernel: tpu_custom_call.1
$region0: #{tpu_custom_call.1}
  #allocation0 [shape = 'u32[]', space=smem, size = 0x4, offset = 0x4, fixed_abs, tag = 'smem constant byte address 0x4 - core index']
  #allocation1 [shape = 'u32[144,128]{1,0:T(1,128)}', space=vmem, size = 0x12000, scoped, tag = 'internal scratch']
  %s0 = inlined_call_operand.hbm [shape: f32[16,64], index: 0, kind: input, shape index: {}]
  %s1 = inlined_call_operand.hbm [shape: f32[64,384], index: 1, kind: input, shape index: {}]
  %s2 = inlined_call_operand.vmem [shape: f32[1,384], index: 2, kind: input, shape index: {}]
  %s3 = inlined_call_operand.hbm [shape: f32[16,112], index: 3, kind: output, shape index: {}]
  %s4 = sld [smem:[#allocation0]]
  $region30: #{tpu_custom_call.1} parent=0
    _
  %s6 = ssub.s32 1, %s4
  %s7 = scalar_select 0, %s6, %s4
  $region1: #{tpu_custom_call.1} parent=0
    #allocation2 [shape = 'u8[8192]{0}', space=vmem, size = 0x2000, scoped, tag = 'input window, operand 0, single buffered']
    #allocation3 [shape = 's32[1]{0}', space=sflag, size = 0x4, scoped, tag = 'scoped memory for tpu_custom_call.1']
    #allocation4 [shape = 's32[1]{0}', space=sflag, size = 0x4, scoped, tag = 'scoped memory for tpu_custom_call.1']
    #allocation5 [shape = 'u8[98304]{0}', space=vmem, size = 0x18000, scoped, tag = 'input window, operand 1, single buffered']
    #allocation6 [shape = 's32[1]{0}', space=sflag, size = 0x4, scoped, tag = 'scoped memory for tpu_custom_call.1']
    #allocation7 [shape = 'u8[8192]{0}', space=vmem, size = 0x2000, scoped, tag = 'output window, operand 0, single buffered']
    %8 = vsyncpa [#allocation3], 0
    %9 = vsyncpa [#allocation6], 0
    %10 = vsyncpa [#allocation4], 0
    // Predicated region
    $region2: #{tpu_custom_call.1} parent=1 // pred_check
      _
    $region3: #{tpu_custom_call.1} parent=1 // pred_check_branch
      %12 = sbr.rel (0) target = $region5
    $region4: #{tpu_custom_call.1} parent=1 // pred_region
      %s14 = ssub.s32 256, 256
      %15 = vsyncadd [#allocation3], %s14
      %s16 = sshll.u32 [#allocation2], 4
      %s17 = int_to_ptr.vmem [resolvable:$true] %s16
      %22 = dma.hbm_to_vmem [thread:$0]  %s0, 256, %s17, [#allocation3], 128, 128, 8
    $region5: #{tpu_custom_call.1} parent=1 // pred_fallthru
      _
    // Predicated region
    $region6: #{tpu_custom_call.1} parent=1 // pred_check
      _
    $region7: #{tpu_custom_call.1} parent=1 // pred_check_branch
      %24 = sbr.rel (0) target = $region9
    $region8: #{tpu_custom_call.1} parent=1 // pred_region
      %s26 = ssub.s32 3072, 3072
      %27 = vsyncadd [#allocation6], %s26
      %s28 = sshll.u32 [#allocation5], 4
      %s29 = int_to_ptr.vmem [resolvable:$true] %s28
      %34 = dma.hbm_to_vmem [thread:$0]  %s1, 3072, %s29, [#allocation6], 384, 384, 24
    $region9: #{tpu_custom_call.1} parent=1 // pred_fallthru
      _
    // Predicated region
    $region10: #{tpu_custom_call.1} parent=1 // pred_check
      _
    $region11: #{tpu_custom_call.1} parent=1 // pred_check_branch
      %36 = sbr.rel (0) target = $region13
    $region12: #{tpu_custom_call.1} parent=1 // pred_region
      _
    $region13: #{tpu_custom_call.1} parent=1 // pred_fallthru
      _
    // Predicated region
    $region14: #{tpu_custom_call.1} parent=1 // pred_check
      _
    $region15: #{tpu_custom_call.1} parent=1 // pred_check_branch
      %38 = sbr.rel (0) target = $region17
    $region16: #{tpu_custom_call.1} parent=1 // pred_region
      %39 = dma.done [#allocation3], 256
    $region17: #{tpu_custom_call.1} parent=1 // pred_fallthru
      _
    // Predicated region
    $region18: #{tpu_custom_call.1} parent=1 // pred_check
      _
    $region19: #{tpu_custom_call.1} parent=1 // pred_check_branch
      %41 = sbr.rel (0) target = $region21
    $region20: #{tpu_custom_call.1} parent=1 // pred_region
      %42 = dma.done [#allocation6], 3072
    $region21: #{tpu_custom_call.1} parent=1 // pred_fallthru
      _
    %v43 = vld [vmem:[#allocation2] sm:$0xff]
    %v44 = vld [vmem:[#allocation2 + $0x8] sm:$0xff]
    %v45 = vld [vmem:[#allocation5] sm:$0xff]
    %v46 = vld [vmem:[#allocation5 + $0x8] sm:$0xff]
    %v47 = vld [vmem:[#allocation5 + $0x10] sm:$0xff]
    %v48 = vld [vmem:[#allocation5 + $0x18] sm:$0xff]
    %v49 = vld [vmem:[#allocation5 + $0x20] sm:$0xff]
    %v50 = vld [vmem:[#allocation5 + $0x28] sm:$0xff]
    %v51 = vld [vmem:[#allocation5 + $0x30] sm:$0xff]
    %v52 = vld [vmem:[#allocation5 + $0x38] sm:$0xff]
    %v53 = vld [vmem:[#allocation5 + $0x40] sm:$0xff]
    %v54 = vld [vmem:[#allocation5 + $0x48] sm:$0xff]
    %v55 = vld [vmem:[#allocation5 + $0x50] sm:$0xff]
    %v56 = vld [vmem:[#allocation5 + $0x58] sm:$0xff]
    %v57 = vld [vmem:[#allocation5 + $0x60] sm:$0xff]
    %v58 = vld [vmem:[#allocation5 + $0x68] sm:$0xff]
    %v59 = vld [vmem:[#allocation5 + $0x70] sm:$0xff]
    %v60 = vld [vmem:[#allocation5 + $0x78] sm:$0xff]
    %v61 = vld [vmem:[#allocation5 + $0x80] sm:$0xff]
    %v62 = vld [vmem:[#allocation5 + $0x88] sm:$0xff]
    %v63 = vld [vmem:[#allocation5 + $0x90] sm:$0xff]
    %v64 = vld [vmem:[#allocation5 + $0x98] sm:$0xff]
    %v65 = vld [vmem:[#allocation5 + $0xa0] sm:$0xff]
    %v66 = vld [vmem:[#allocation5 + $0xa8] sm:$0xff]
    %v67 = vld [vmem:[#allocation5 + $0xb0] sm:$0xff]
    %v68 = vld [vmem:[#allocation5 + $0xb8] sm:$0xff]
    %v69 = vld [vmem:[%s2] sm:$0x7]
    %v71 = vlaneseq
    %v72 = vshrl.u32 %v71, 7
    %v73 = vsub.s32 0, %v72
    %v74 = vrot.slane %v69, %v73
    %v75 = vlaneseq
    %v76 = vshrl.u32 %v75, 7
    %v77 = vsub.s32 1, %v76
    %v78 = vrot.slane %v69, %v77
    %v79 = vlaneseq
    %v80 = vshrl.u32 %v79, 7
    %v81 = vsub.s32 2, %v80
    %v82 = vrot.slane %v69, %v81
    %vm86 = vcmask 523264
    %v88 = vsel %vm86, %v43, 0
    %v91 = vsel %vm86, %v44, 0
    %93 = vmatprep.subr.mxu0 0.0
    %94 = vmatpush1.msra.mxu0 0.0
    %95 = vmatprep.subr.mxu0 0.0
    %96 = vmatpush1.msra.mxu0 0.0
    %97 = vmatprep.subr.mxu0 0.0
    %98 = vmatpush1.msra.mxu0 0.0
    %99 = vmatprep.subr.mxu0 0.0
    %100 = vmatpush1.msra.mxu0 0.0
    %101 = vmatprep.subr.mxu0 0.0
    %102 = vmatpush1.msra.mxu0 0.0
    %103 = vmatprep.subr.mxu0 0.0
    %104 = vmatpush1.msra.mxu0 0.0
    %105 = vmatprep.subr.mxu0 0.0
    %106 = vmatpush1.msra.mxu0 0.0
    %107 = vmatprep.subr.mxu0 0.0
    %108 = vmatpush1.msra.mxu0 0.0
    %109 = vmatprep.subr.mxu0 %v67
    %110 = vmatpush1.msra.mxu0 %v66
    %111 = vmatprep.subr.mxu0 %v64
    %112 = vmatpush1.msra.mxu0 %v63
    %113 = vmatprep.subr.mxu0 %v61
    %114 = vmatpush1.msra.mxu0 %v60
    %115 = vmatprep.subr.mxu0 %v58
    %116 = vmatpush1.msra.mxu0 %v57
    %117 = vmatprep.subr.mxu0 %v55
    %118 = vmatpush1.msra.mxu0 %v54
    %119 = vmatprep.subr.mxu0 %v52
    %120 = vmatpush1.msra.mxu0 %v51
    %121 = vmatprep.subr.mxu0 %v49
    %122 = vmatpush1.msra.mxu0 %v48
    %123 = vmatprep.subr.mxu0 %v46
    %124 = vmatpush1.msra.mxu0 %v45
    %125 = vmatprep.subr.mxu0 0.0
    %126 = vmatpush2.msra.mxu0 0.0
    %127 = vmatprep.subr.mxu0 0.0
    %128 = vmatpush2.msra.mxu0 0.0
    %129 = vmatprep.subr.mxu0 0.0
    %130 = vmatpush2.msra.mxu0 0.0
    %131 = vmatprep.subr.mxu0 0.0
    %132 = vmatpush2.msra.mxu0 0.0
    %133 = vmatprep.subr.mxu0 0.0
    %134 = vmatpush2.msra.mxu0 0.0
    %135 = vmatprep.subr.mxu0 0.0
    %136 = vmatpush2.msra.mxu0 0.0
    %137 = vmatprep.subr.mxu0 0.0
    %138 = vmatpush2.msra.mxu0 0.0
    %139 = vmatprep.subr.mxu0 0.0
    %140 = vmatpush2.msra.mxu0 0.0
    %141 = vmatprep.subr.mxu0 0.0
    %142 = vmatpush2.msra.mxu0 0.0
    %143 = vmatprep.subr.mxu0 0.0
    %144 = vmatpush2.msra.mxu0 0.0
    %145 = vmatprep.subr.mxu0 0.0
    %146 = vmatpush2.msra.mxu0 0.0
    %147 = vmatprep.subr.mxu0 0.0
    %148 = vmatpush2.msra.mxu0 0.0
    %149 = vmatprep.subr.mxu0 0.0
    %150 = vmatpush2.msra.mxu0 0.0
    %151 = vmatprep.subr.mxu0 0.0
    %152 = vmatpush2.msra.mxu0 0.0
    %153 = vmatprep.subr.mxu0 0.0
    %154 = vmatpush2.msra.mxu0 0.0
    %155 = vmatprep.subr.mxu0 0.0
    %156 = vmatpush2.msra.mxu0 0.0
    %157 = vmatprep.mubr.f32.mxu0 0.0
    %158 = vmatmul.mubr.f32.gmra.mxu0 %v88
    %v159 = vpop.f32.mrf.mxu0
    %v160 = vadd.f32 %v74, %v159
    %v161 = vpop.f32.mrf.mxu0
    %v162 = vadd.f32 %v78, %v161
    %163 = vmatprep.mubr.f32.mxu0 0.0
    %164 = vmatmul.mubr.f32.gmra.mxu0 %v91
    %v165 = vpop.f32.mrf.mxu0
    %v166 = vadd.f32 %v74, %v165
    %v167 = vpop.f32.mrf.mxu0
    %v168 = vadd.f32 %v78, %v167
    %169 = vdwg.mxu0
    %170 = vmatprep.subr.mxu0 0.0
    %171 = vmatpush1.msra.mxu0 0.0
    %172 = vmatprep.subr.mxu0 0.0
    %173 = vmatpush1.msra.mxu0 0.0
    %174 = vmatprep.subr.mxu0 0.0
    %175 = vmatpush1.msra.mxu0 0.0
    %176 = vmatprep.subr.mxu0 0.0
    %177 = vmatpush1.msra.mxu0 0.0
    %178 = vmatprep.subr.mxu0 0.0
    %179 = vmatpush1.msra.mxu0 0.0
    %180 = vmatprep.subr.mxu0 0.0
    %181 = vmatpush1.msra.mxu0 0.0
    %182 = vmatprep.subr.mxu0 0.0
    %183 = vmatpush1.msra.mxu0 0.0
    %184 = vmatprep.subr.mxu0 0.0
    %185 = vmatpush1.msra.mxu0 0.0
    %186 = vmatprep.subr.mxu0 0.0
    %187 = vmatpush1.msra.mxu0 %v68
    %188 = vmatprep.subr.mxu0 0.0
    %189 = vmatpush1.msra.mxu0 %v65
    %190 = vmatprep.subr.mxu0 0.0
    %191 = vmatpush1.msra.mxu0 %v62
    %192 = vmatprep.subr.mxu0 0.0
    %193 = vmatpush1.msra.mxu0 %v59
    %194 = vmatprep.subr.mxu0 0.0
    %195 = vmatpush1.msra.mxu0 %v56
    %196 = vmatprep.subr.mxu0 0.0
    %197 = vmatpush1.msra.mxu0 %v53
    %198 = vmatprep.subr.mxu0 0.0
    %199 = vmatpush1.msra.mxu0 %v50
    %200 = vmatprep.subr.mxu0 0.0
    %201 = vmatpush1.msra.mxu0 %v47
    %202 = vmatprep.subr.mxu0 0.0
    %203 = vmatpush2.msra.mxu0 0.0
    %204 = vmatprep.subr.mxu0 0.0
    %205 = vmatpush2.msra.mxu0 0.0
    %206 = vmatprep.subr.mxu0 0.0
    %207 = vmatpush2.msra.mxu0 0.0
    %208 = vmatprep.subr.mxu0 0.0
    %209 = vmatpush2.msra.mxu0 0.0
    %210 = vmatprep.subr.mxu0 0.0
    %211 = vmatpush2.msra.mxu0 0.0
    %212 = vmatprep.subr.mxu0 0.0
    %213 = vmatpush2.msra.mxu0 0.0
    %214 = vmatprep.subr.mxu0 0.0
    %215 = vmatpush2.msra.mxu0 0.0
    %216 = vmatprep.subr.mxu0 0.0
    %217 = vmatpush2.msra.mxu0 0.0
    %218 = vmatprep.subr.mxu0 0.0
    %219 = vmatpush2.msra.mxu0 0.0
    %220 = vmatprep.subr.mxu0 0.0
    %221 = vmatpush2.msra.mxu0 0.0
    %222 = vmatprep.subr.mxu0 0.0
    %223 = vmatpush2.msra.mxu0 0.0
    %224 = vmatprep.subr.mxu0 0.0
    %225 = vmatpush2.msra.mxu0 0.0
    %226 = vmatprep.subr.mxu0 0.0
    %227 = vmatpush2.msra.mxu0 0.0
    %228 = vmatprep.subr.mxu0 0.0
    %229 = vmatpush2.msra.mxu0 0.0
    %230 = vmatprep.subr.mxu0 0.0
    %231 = vmatpush2.msra.mxu0 0.0
    %232 = vmatprep.subr.mxu0 0.0
    %233 = vmatpush2.msra.mxu0 0.0
    %234 = vmatprep.mubr.f32.mxu0 0.0
    %235 = vmatmul.mubr.f32.gmra.mxu0 %v88
    %v236 = vpop.f32.mrf.mxu0
    %v237 = vadd.f32 %v82, %v236
    %v238 = vpop.f32.mrf.mxu0
    %239 = vmatprep.mubr.f32.mxu0 0.0
    %240 = vmatmul.mubr.f32.gmra.mxu0 %v91
    %v241 = vpop.f32.mrf.mxu0
    %v242 = vadd.f32 %v82, %v241
    %v243 = vpop.f32.mrf.mxu0
    %244 = vdwg.mxu0
    %v245 = vxor.u32 %v162, 2147483648
    %v246 = vxor.u32 %v168, 2147483648
    %v247 = vmul.f32 %v245, 1.442695
    %v248 = vpow.pop %v247
    %v249 = vmul.f32 %v246, 1.442695
    %v250 = vpow.pop %v249
    %v251 = vadd.f32 %v248, 1.0
    %v252 = vadd.f32 %v250, 1.0
    %v253 = vrcp.pop %v251
    %v254 = vmul.f32 1.0, %v253
    %v255 = vrcp.pop %v252
    %v256 = vmul.f32 1.0, %v255
    %v257 = vadd.f32 %v160, %v254
    %v258 = vadd.f32 %v166, %v256
    %v259 = vadd.f32 %v257, %v237
    %v260 = vadd.f32 %v258, %v242
    %v261 = vmax.f32 %v259, 0.0
    %v262 = vmax.f32 %v260, 0.0
    %vm263 = vcmask 916480
    %264 = vst.msk [vmem:[#allocation7] sm:$0xff] %vm263, %v261
    %265 = vst.msk [vmem:[#allocation7 + $0x8] sm:$0xff] %vm263, %v262
    // Predicated region
    $region22: #{tpu_custom_call.1} parent=1 // pred_check
      _
    $region23: #{tpu_custom_call.1} parent=1 // pred_check_branch
      %267 = sbr.rel (0) target = $region25
    $region24: #{tpu_custom_call.1} parent=1 // pred_region
      %s269 = ssub.s32 256, 256
      %270 = vsyncadd [#allocation4], %s269
      %s271 = sshll.u32 [#allocation7], 4
      %s272 = int_to_ptr.vmem [resolvable:$true] %s271
      %277 = dma.vmem_to_hbm [thread:$0]  %s272, 256, %s3, [#allocation4], 128, 128, 8
    $region25: #{tpu_custom_call.1} parent=1 // pred_fallthru
      _
    // Predicated region
    $region26: #{tpu_custom_call.1} parent=1 // pred_check
      _
    $region27: #{tpu_custom_call.1} parent=1 // pred_check_branch
      %279 = sbr.rel (0) target = $region29
    $region28: #{tpu_custom_call.1} parent=1 // pred_region
      %280 = dma.done [#allocation4], 256
    $region29: #{tpu_custom_call.1} parent=1 // pred_fallthru
      _
    %281 = vsyncpa [#allocation3], 1
    %282 = vsyncpa [#allocation6], 1
    %283 = vsyncpa [#allocation4], 1

</llo_original>
